<compile_context>
chip_gen: v5e
topology: v5e:2x2
jax: 0.10.0
libtpu: 0.0.40
codegen_flags: <defaults>
</compile_context>

<pallas_src>
from functools import partial

import jax
import jax.numpy as jnp
from jax import lax
from jax.experimental import pallas as pl
from jax.experimental.pallas import tpu as pltpu


# ---------------------------------------------------------------------------
# Gradient reversal layer: identity forward, -lambda * grad backward.
# ---------------------------------------------------------------------------
@partial(jax.custom_vjp, nondiff_argnums=(1,))
def gradient_reversal(x, lambda_):
    return x


def _grl_fwd(x, lambda_):
    return x, None


def _grl_bwd(lambda_, _res, g):
    return (-lambda_ * g,)


gradient_reversal.defvjp(_grl_fwd, _grl_bwd)


# ---------------------------------------------------------------------------
# Pallas kernel: one batch tile of  y = x @ W^T + b
#   x_ref : (TILE_B, E)      VMEM (batch-tiled, double-buffered by Pallas)
#   w_ref : (P_pad, E)       VMEM (resident across the whole grid)
#   b_ref : (1, P_pad)       VMEM (resident across the whole grid)
#   o_ref : (TILE_B, P_pad)  VMEM (lane-dense: P_pad is a multiple of 128)
# ---------------------------------------------------------------------------
def _adversary_kernel(x_ref, w_ref, b_ref, o_ref):
    acc = lax.dot_general(
        x_ref[...], w_ref[...],
        dimension_numbers=(((1,), (1,)), ((), ())),   # contract on E (no W^T)
        preferred_element_type=jnp.float32)
    o_ref[...] = (acc + b_ref[...].astype(jnp.float32)).astype(o_ref.dtype)


# ---------------------------------------------------------------------------
# Wrapper: padding, tiling, pallas_call, custom_vjp.
# ---------------------------------------------------------------------------
def _round_up(x, m):
    return (x + m - 1) // m * m


def _choose_tile_b(E, P_pad, itemsize, budget_bytes=24 * 1024 * 1024):
    """Largest batch tile (<= 512 rows, multiple of 8) whose double-buffered
    footprint fits the budget (sized conservatively for v7x's smaller VMEM)."""
    tb = 512
    while tb > 8:
        footprint = (2 * tb * E + 2 * tb * P_pad + P_pad * E + P_pad) * itemsize
        if footprint <= budget_bytes:
            break
        tb //= 2
    return max(tb, 8)


def _linear_pallas_impl(x, weight, bias):
    """y = x @ W^T + b with W in native nn.Linear (P, E) layout."""
    B, E = x.shape
    P = weight.shape[0]
    itemsize = max(jnp.dtype(x.dtype).itemsize, 4)

    # Lane-dense output: pad num_protected up to a multiple of 128.
    P_pad = max(_round_up(P, 128), 128)

    tile_b = _choose_tile_b(E, P_pad, itemsize)
    tile_b = min(tile_b, _round_up(B, 8))
    B_pad = _round_up(B, tile_b)

    x_p = x if B_pad == B else jnp.zeros((B_pad, E), x.dtype).at[:B].set(x)
    if P_pad == P:
        w_p, b_p = weight, bias
    else:
        w_p = jnp.zeros((P_pad, E), weight.dtype).at[:P].set(weight)
        b_p = jnp.zeros((P_pad,), bias.dtype).at[:P].set(bias)
    b2d = b_p.reshape(1, P_pad)

    grid = (B_pad // tile_b,)

    footprint = (2 * tile_b * E + 2 * tile_b * P_pad + P_pad * E + P_pad) * itemsize
    vmem_limit = int(min(max(2 * footprint, 16 * 1024 * 1024), 48 * 1024 * 1024))

    cost = pl.CostEstimate(
        flops=2 * B_pad * E * P_pad,
        transcendentals=0,
        bytes_accessed=itemsize * (B_pad * E + P_pad * E + B_pad * P_pad + P_pad))

    # TODO(synk): optionally cast x / weight to bf16 for the MXU on v6e/v7x
    # (keep f32 accumulate + f32 bias epilogue); kept f32 here to match the
    # reference numerics exactly.
    out = pl.pallas_call(
        _adversary_kernel,
        out_shape=jax.ShapeDtypeStruct((B_pad, P_pad), x.dtype),
        grid_spec=pltpu.PrefetchScalarGridSpec(
            num_scalar_prefetch=0,
            grid=grid,
            in_specs=[
                pl.BlockSpec((tile_b, E), lambda i: (i, 0)),   # batch-tiled x
                pl.BlockSpec((P_pad, E), lambda i: (0, 0)),    # resident weight
                pl.BlockSpec((1, P_pad), lambda i: (0, 0)),    # resident bias
            ],
            out_specs=pl.BlockSpec((tile_b, P_pad), lambda i: (i, 0)),
        ),
        compiler_params=pltpu.CompilerParams(
            dimension_semantics=("parallel",),
            vmem_limit_bytes=vmem_limit),
        cost_estimate=cost,
    )(x_p, w_p, b2d)

    return out[:B, :P]


@jax.custom_vjp
def linear_pallas(x, weight, bias):
    return _linear_pallas_impl(x, weight, bias)


def _linear_fwd(x, weight, bias):
    return _linear_pallas_impl(x, weight, bias), (x, weight)


def _linear_bwd(res, g):
    x, weight = res
    dx = jnp.dot(g, weight)     # (B, E)
    dw = jnp.dot(g.T, x)        # (P, E)
    db = jnp.sum(g, axis=0)     # (P,)
    return dx, dw, db


linear_pallas.defvjp(_linear_fwd, _linear_bwd)


def adversary_forward(x, weight, bias, lambda_=1.0):
    """Equivalent of Adversary.forward.

    x      : (batch, embedding_dim)
    weight : (num_protected, embedding_dim)  -- PyTorch nn.Linear layout
    bias   : (num_protected,)
    """
    x = gradient_reversal(x, lambda_)   # identity forward, -lambda * grad
    return linear_pallas(x, weight, bias)


# ---------------------------------------------------------------------------
# Deterministic parameter init (mimics nn.Linear's U(-1/sqrt(fan_in), ...))
# ---------------------------------------------------------------------------
def init_adversary_params(key, embedding_dim, num_protected):
    kw, kb = jax.random.split(key)
    bound = 1.0 / jnp.sqrt(embedding_dim)
    weight = jax.random.uniform(
        kw, (num_protected, embedding_dim), jnp.float32, -bound, bound)
    bias = jax.random.uniform(
        kb, (num_protected,), jnp.float32, -bound, bound)
    return weight, bias


if __name__ == "__main__":
    key = jax.random.PRNGKey(0)
    k_x, k_p = jax.random.split(key)

    batch = 8
    embedding_dim = 32
    num_protected = 4

    x = jax.random.normal(k_x, (batch, embedding_dim), jnp.float32)
    weight, bias = init_adversary_params(k_p, embedding_dim, num_protected)

    out = jax.block_until_ready(adversary_forward(x, weight, bias, lambda_=1.0))

    # Forward reference check (same math as torch.nn.Linear).
    ref = x @ weight.T + bias
    assert out.shape == (batch, num_protected)
    assert jnp.allclose(out, ref, atol=1e-5, rtol=1e-5)

    # Gradient check: GRL flips the sign of dL/dx.
    loss = lambda xx: jnp.sum(adversary_forward(xx, weight, bias, lambda_=1.0))
    gx = jax.block_until_ready(jax.grad(loss)(x))
    ref_gx = -(jnp.ones((batch, num_protected)) @ weight)
    assert jnp.allclose(gx, ref_gx, atol=1e-5, rtol=1e-5)

    print("KERNEL_OK")
</pallas_src>

<mosaic_0001>
module attributes {stable_mosaic.version = 11 : i64} {
  func.func @_adversary_kernel(%arg0: i32, %arg1: memref<8x32xf32, #tpu.memory_space<vmem>>, %arg2: memref<128x32xf32, #tpu.memory_space<vmem>>, %arg3: memref<1x128xf32, #tpu.memory_space<vmem>>, %arg4: memref<8x128xf32, #tpu.memory_space<vmem>>) attributes {dimension_semantics = [#tpu.dimension_semantics<parallel>], iteration_bounds = array<i64: 1>, scalar_prefetch = 0 : i64, scratch_operands = 0 : i64, tpu.core_type = #tpu.core_type<tc>, window_params = [{transform_indices = @transform_0, window_bounds = array<i64: 8, 32>}, {pipeline_mode = #tpu.pipeline_mode<synchronous>, transform_indices = @transform_1, window_bounds = array<i64: 128, 32>}, {pipeline_mode = #tpu.pipeline_mode<synchronous>, transform_indices = @transform_2, window_bounds = array<i64: 1, 128>}, {transform_indices = @transform_3, window_bounds = array<i64: 8, 128>}]} {
    %c0 = arith.constant 0 : index
    %c0_0 = arith.constant 0 : index
    %0 = vector.load %arg1[%c0, %c0_0] : memref<8x32xf32, #tpu.memory_space<vmem>>, vector<8x32xf32>
    %c0_1 = arith.constant 0 : index
    %c0_2 = arith.constant 0 : index
    %1 = vector.load %arg2[%c0_1, %c0_2] : memref<128x32xf32, #tpu.memory_space<vmem>>, vector<128x32xf32>
    %cst = arith.constant dense<0.000000e+00> : vector<8x128xf32>
    %2 = tpu.matmul %0, %1, %cst {dimension_numbers = #tpu.dot_dimension_numbers<[1], [1], [0], [0], [0, 0, 1, 0], [], []>} : vector<8x32xf32>, vector<128x32xf32>, vector<8x128xf32> -> vector<8x128xf32>
    %c0_3 = arith.constant 0 : index
    %c0_4 = arith.constant 0 : index
    %3 = vector.load %arg3[%c0_3, %c0_4] : memref<1x128xf32, #tpu.memory_space<vmem>>, vector<1x128xf32>
    %4 = vector.broadcast %3 : vector<1x128xf32> to vector<8x128xf32>
    %5 = arith.addf %2, %4 : vector<8x128xf32>
    %c0_5 = arith.constant 0 : index
    %c0_6 = arith.constant 0 : index
    %6 = vector.load %arg4[%c0_5, %c0_6] : memref<8x128xf32, #tpu.memory_space<vmem>>, vector<8x128xf32>
    tpu.vector_store %arg4[%c0_5, %c0_6], %5 {strides = array<i32>} : memref<8x128xf32, #tpu.memory_space<vmem>>, vector<8x128xf32>,
    return
  }
  func.func @transform_0(%arg0: i32) -> (i32, i32) {
    %c0_i32 = arith.constant 0 : i32
    %c0_i32_0 = arith.constant 0 : i32
    return %arg0, %c0_i32 : i32, i32
  }
  func.func @transform_1(%arg0: i32) -> (i32, i32) {
    %c0_i32 = arith.constant 0 : i32
    %c0_i32_0 = arith.constant 0 : i32
    %c0_i32_1 = arith.constant 0 : i32
    return %c0_i32, %c0_i32_0 : i32, i32
  }
  func.func @transform_2(%arg0: i32) -> (i32, i32) {
    %c0_i32 = arith.constant 0 : i32
    %c0_i32_0 = arith.constant 0 : i32
    %c0_i32_1 = arith.constant 0 : i32
    return %c0_i32, %c0_i32_0 : i32, i32
  }
  func.func @transform_3(%arg0: i32) -> (i32, i32) {
    %c0_i32 = arith.constant 0 : i32
    %c0_i32_0 = arith.constant 0 : i32
    return %arg0, %c0_i32 : i32, i32
  }
}

</mosaic_0001>

<llo_original>
// kernel: tpu_custom_call.1
$region0: #{tpu_custom_call.1}
  #allocation0 [shape = 'u32[]', space=smem, size = 0x4, offset = 0x4, fixed_abs, tag = 'smem constant byte address 0x4 - core index']
  #allocation1 [shape = 'u32[72,128]{1,0:T(1,128)}', space=vmem, size = 0x9000, scoped, tag = 'internal scratch']
  %s0 = inlined_call_operand.vmem [shape: f32[8,32], index: 0, kind: input, shape index: {}]
  %s1 = inlined_call_operand.vmem [shape: f32[128,32], index: 1, kind: input, shape index: {}]
  %s2 = inlined_call_operand.vmem [shape: f32[1,128], index: 2, kind: input, shape index: {}]
  %s3 = inlined_call_operand.hbm [shape: f32[8,128], index: 3, kind: output, shape index: {}]
  %s4 = sld [smem:[#allocation0]]
  $region22: #{tpu_custom_call.1} parent=0
    _
  %s6 = ssub.s32 1, %s4
  %s7 = scalar_select 0, %s6, %s4
  $region1: #{tpu_custom_call.1} parent=0
    #allocation2 [shape = 'u8[4096]{0}', space=vmem, size = 0x1000, scoped, tag = 'output window, operand 0, single buffered']
    #allocation3 [shape = 's32[1]{0}', space=sflag, size = 0x4, scoped, tag = 'scoped memory for tpu_custom_call.1']
    %8 = vsyncpa [#allocation3], 0
    // Predicated region
    $region2: #{tpu_custom_call.1} parent=1 // pred_check
      _
    $region3: #{tpu_custom_call.1} parent=1 // pred_check_branch
      %10 = sbr.rel (0) target = $region5
    $region4: #{tpu_custom_call.1} parent=1 // pred_region
      _
    $region5: #{tpu_custom_call.1} parent=1 // pred_fallthru
      _
    // Predicated region
    $region6: #{tpu_custom_call.1} parent=1 // pred_check
      _
    $region7: #{tpu_custom_call.1} parent=1 // pred_check_branch
      %12 = sbr.rel (0) target = $region9
    $region8: #{tpu_custom_call.1} parent=1 // pred_region
      _
    $region9: #{tpu_custom_call.1} parent=1 // pred_fallthru
      _
    // Predicated region
    $region10: #{tpu_custom_call.1} parent=1 // pred_check
      _
    $region11: #{tpu_custom_call.1} parent=1 // pred_check_branch
      %14 = sbr.rel (0) target = $region13
    $region12: #{tpu_custom_call.1} parent=1 // pred_region
      _
    $region13: #{tpu_custom_call.1} parent=1 // pred_fallthru
      _
    %v15 = vld [vmem:[%s0] sm:$0xff]
    %v16 = vld [vmem:[%s1] sm:$0xff]
    %v17 = vld [vmem:[%s1 + $0x8] sm:$0xff]
    %v18 = vld [vmem:[%s1 + $0x10] sm:$0xff]
    %v19 = vld [vmem:[%s1 + $0x18] sm:$0xff]
    %v20 = vld [vmem:[%s1 + $0x20] sm:$0xff]
    %v21 = vld [vmem:[%s1 + $0x28] sm:$0xff]
    %v22 = vld [vmem:[%s1 + $0x30] sm:$0xff]
    %v23 = vld [vmem:[%s1 + $0x38] sm:$0xff]
    %v24 = vld [vmem:[%s1 + $0x40] sm:$0xff]
    %v25 = vld [vmem:[%s1 + $0x48] sm:$0xff]
    %v26 = vld [vmem:[%s1 + $0x50] sm:$0xff]
    %v27 = vld [vmem:[%s1 + $0x58] sm:$0xff]
    %v28 = vld [vmem:[%s1 + $0x60] sm:$0xff]
    %v29 = vld [vmem:[%s1 + $0x68] sm:$0xff]
    %v30 = vld [vmem:[%s1 + $0x70] sm:$0xff]
    %v31 = vld [vmem:[%s1 + $0x78] sm:$0xff]
    %v32 = vld [vmem:[%s2] sm:$0x1]
    %v34 = vperm.slane %v32, 0
    %vm36 = vcmask 261120
    %v38 = vsel %vm36, %v15, 0
    %v41 = vsel %vm36, %v16, 0
    %v44 = vsel %vm36, %v17, 0
    %v47 = vsel %vm36, %v18, 0
    %v50 = vsel %vm36, %v19, 0
    %v53 = vsel %vm36, %v20, 0
    %v56 = vsel %vm36, %v21, 0
    %v59 = vsel %vm36, %v22, 0
    %v62 = vsel %vm36, %v23, 0
    %v65 = vsel %vm36, %v24, 0
    %v68 = vsel %vm36, %v25, 0
    %v71 = vsel %vm36, %v26, 0
    %v74 = vsel %vm36, %v27, 0
    %v77 = vsel %vm36, %v28, 0
    %v80 = vsel %vm36, %v29, 0
    %v83 = vsel %vm36, %v30, 0
    %v86 = vsel %vm36, %v31, 0
    %88 = vmatpush.xpose.msra.mxu0 %v86
    %89 = vmatpush.xpose.msra.mxu0 %v83
    %90 = vmatpush.xpose.msra.mxu0 %v80
    %91 = vmatpush.xpose.msra.mxu0 %v77
    %92 = vmatpush.xpose.msra.mxu0 %v74
    %93 = vmatpush.xpose.msra.mxu0 %v71
    %94 = vmatpush.xpose.msra.mxu0 %v68
    %95 = vmatpush.xpose.msra.mxu0 %v65
    %96 = vmatpush.xpose.msra.mxu0 %v62
    %97 = vmatpush.xpose.msra.mxu0 %v59
    %98 = vmatpush.xpose.msra.mxu0 %v56
    %99 = vmatpush.xpose.msra.mxu0 %v53
    %100 = vmatpush.xpose.msra.mxu0 %v50
    %101 = vmatpush.xpose.msra.mxu0 %v47
    %102 = vmatpush.xpose.msra.mxu0 %v44
    %103 = vmatpush.xpose.msra.mxu0 %v41
    %104 = vmatmul.f32.gmra.mxu0 %v38
    %v105 = vpop.f32.mrf.mxu0
    %v106 = vadd.f32 %v34, %v105
    %107 = vdwg.mxu0
    %108 = vst [vmem:[#allocation2] sm:$0xff] %v106
    // Predicated region
    $region14: #{tpu_custom_call.1} parent=1 // pred_check
      _
    $region15: #{tpu_custom_call.1} parent=1 // pred_check_branch
      %110 = sbr.rel (0) target = $region17
    $region16: #{tpu_custom_call.1} parent=1 // pred_region
      %112 = vsyncadd [#allocation3], 0
      %s114 = sshll.u32 [#allocation2], 4
      %s115 = int_to_ptr.vmem [resolvable:$true] %s114
      %s116 = sshll.u32 %s3, 4
      %s117 = int_to_ptr.hbm [resolvable:$true] %s116
      %119 = dma.vmem_to_hbm [thread:$0]  %s115, 128, %s117, [#allocation3]
    $region17: #{tpu_custom_call.1} parent=1 // pred_fallthru
      _
    // Predicated region
    $region18: #{tpu_custom_call.1} parent=1 // pred_check
      _
    $region19: #{tpu_custom_call.1} parent=1 // pred_check_branch
      %121 = sbr.rel (0) target = $region21
    $region20: #{tpu_custom_call.1} parent=1 // pred_region
      %123 = dma.done [#allocation3], 128
    $region21: #{tpu_custom_call.1} parent=1 // pred_fallthru
      _
    %124 = vsyncpa [#allocation3], 1

</llo_original>
